<compile_context>
chip_gen: v7x
topology: tpu7x:2x2x1
jax: 0.10.0
libtpu: 0.0.40
codegen_flags: <defaults>
</compile_context>

<pallas_src>
import functools

import jax
import jax.numpy as jnp
from jax.experimental import pallas as pl
from jax.experimental.pallas import tpu as pltpu

HIDDEN = 256
BN_EPS = 1e-5
LANE = 128
NEG_BIG = -1e30          # bias for padded class lanes -> softmax weight exactly 0
DEFAULT_BLOCK_B = 512    # batch rows per grid step; small enough for v7x VMEM


def _round_up(x, m):
    return ((x + m - 1) // m) * m


def _softmax_store(logits, out_ref):
    """Row softmax; EUP approx reciprocal + one Newton refinement step."""
    m = jnp.max(logits, axis=-1, keepdims=True)
    e = jnp.exp(logits - m)
    s = jnp.sum(e, axis=-1, keepdims=True)
    r = pl.reciprocal(s, approx=True)
    r = r * (2.0 - s * r)  # Newton step: rel err ~ (1e-4)^2
    out_ref[...] = (e * r).astype(out_ref.dtype)


# --------------------------------------------------------------------------
# Fused single-call kernel (whole batch in one grid step -> exact BN stats).
# --------------------------------------------------------------------------
def fused_kernel(x_ref, w1_ref, b1_ref, gamma_ref, w2_ref, b2_ref, out_ref, *,
                 batch):
    # Linear(D, H): bf16 operands on the MXU, f32 accumulate.
    h = jnp.dot(x_ref[...], w1_ref[...], preferred_element_type=jnp.float32)
    h = jnp.maximum(h + b1_ref[...], 0.0)                      # ReLU

    # BatchNorm1d training-mode stats, one pass (sum & sumsq stream over h).
    inv_b = 1.0 / batch
    mean = jnp.sum(h, axis=0, keepdims=True) * inv_b           # (1, H)
    var = jnp.sum(h * h, axis=0, keepdims=True) * inv_b - mean * mean
    scale = gamma_ref[...] * jax.lax.rsqrt(var + BN_EPS)       # (1, H)
    shift = -mean * scale
    hn = h * scale + shift          # beta already folded into b2_eff

    # Linear(H, C_pad): bf16 operands on the MXU, f32 accumulate.
    logits = jnp.dot(hn.astype(jnp.bfloat16), w2_ref[...],
                     preferred_element_type=jnp.float32) + b2_ref[...]
    # padded class lanes have bias -1e30 -> exp underflows to exactly 0
    _softmax_store(logits, out_ref)


# --------------------------------------------------------------------------
# Two-pass tiled path for large batches.
# Pass 1: accumulate BN sum / sum-of-squares of relu(x@W1+b1) over batch tiles.
# --------------------------------------------------------------------------
def stats_kernel(x_ref, w1_ref, b1_ref, sum_ref, sumsq_ref, *, batch,
                 padded_batch):
    i = pl.program_id(0)

    @pl.when(i == 0)
    def _():
        sum_ref[...] = jnp.zeros_like(sum_ref)
        sumsq_ref[...] = jnp.zeros_like(sumsq_ref)

    h = jnp.dot(x_ref[...], w1_ref[...], preferred_element_type=jnp.float32)
    h = jnp.maximum(h + b1_ref[...], 0.0)

    if padded_batch != batch:  # static: mask zero-padded rows out of the stats
        b_tile = x_ref.shape[0]
        row = i * b_tile + jax.lax.broadcasted_iota(jnp.int32, h.shape, 0)
        h = jnp.where(row < batch, h, 0.0)

    sum_ref[...] += jnp.sum(h, axis=0, keepdims=True)
    sumsq_ref[...] += jnp.sum(h * h, axis=0, keepdims=True)


# Pass 2: per-tile normalize + classify + softmax (tiles independent).
def apply_kernel(x_ref, w1_ref, b1_ref, gamma_ref, w2_ref, b2_ref,
                 sum_ref, sumsq_ref, out_ref, *, batch):
    h = jnp.dot(x_ref[...], w1_ref[...], preferred_element_type=jnp.float32)
    h = jnp.maximum(h + b1_ref[...], 0.0)

    inv_b = 1.0 / batch
    mean = sum_ref[...] * inv_b
    var = sumsq_ref[...] * inv_b - mean * mean
    scale = gamma_ref[...] * jax.lax.rsqrt(var + BN_EPS)
    shift = -mean * scale
    hn = h * scale + shift          # beta already folded into b2_eff

    logits = jnp.dot(hn.astype(jnp.bfloat16), w2_ref[...],
                     preferred_element_type=jnp.float32) + b2_ref[...]
    _softmax_store(logits, out_ref)


# --------------------------------------------------------------------------
# Parameter prep (done ONCE, hoisted out of the per-call path).
# --------------------------------------------------------------------------
def prepare_params(w1, b1, gamma, beta, w2, b2):
    H = w1.shape[1]
    C = w2.shape[1]
    C_pad = max(LANE, _round_up(C, LANE))

    w1_bf = w1.astype(jnp.bfloat16)                              # (D, H)
    w2_pad = jnp.zeros((H, C_pad), jnp.float32).at[:, :C].set(w2)
    w2_bf = w2_pad.astype(jnp.bfloat16)                          # (H, C_pad)
    # Fold BN beta into the second-layer bias: beta @ W2 + b2 (f32).
    # Padded class lanes keep -1e30 so their softmax weight is exactly 0.
    b2_eff = jnp.full((1, C_pad), NEG_BIG, jnp.float32)
    b2_eff = b2_eff.at[:, :C].set(beta.reshape(1, H) @ w2 + b2.reshape(1, C))

    return {
        "w1": w1_bf,
        "b1": b1.reshape(1, H).astype(jnp.float32),
        "gamma": gamma.reshape(1, H).astype(jnp.float32),
        "w2": w2_bf,
        "b2": b2_eff,
    }


@functools.partial(jax.jit,
                   static_argnames=("num_classes", "block_b", "slice_output"))
def mlp_forward(x, params, *, num_classes, block_b=DEFAULT_BLOCK_B,
                slice_output=True):
    w1, b1, gamma, w2, b2 = (params["w1"], params["b1"], params["gamma"],
                             params["w2"], params["b2"])
    B, D = x.shape
    H = w1.shape[1]
    C_pad = w2.shape[1]
    x_bf = x.astype(jnp.bfloat16)  # data cast stays in the per-call path

    full = lambda shape: pl.BlockSpec(shape, lambda i: (0,) * len(shape))
    cparams = lambda sem: pltpu.CompilerParams(
        dimension_semantics=(sem,), vmem_limit_bytes=32 * 1024 * 1024)

    if B <= block_b:
        # Whole batch in one grid step: single fused kernel; BN batch stats
        # cover the full batch (matches PyTorch BatchNorm1d training mode).
        out_pad = pl.pallas_call(
            functools.partial(fused_kernel, batch=B),
            out_shape=jax.ShapeDtypeStruct((B, C_pad), jnp.float32),
            grid_spec=pltpu.PrefetchScalarGridSpec(
                num_scalar_prefetch=0,
                grid=(1,),
                in_specs=[full((B, D)), full((D, H)), full((1, H)),
                          full((1, H)), full((H, C_pad)), full((1, C_pad))],
                out_specs=full((B, C_pad)),
            ),
            compiler_params=cparams("arbitrary"),
        )(x_bf, w1, b1, gamma, w2, b2)
    else:
        # Large batch: two-pass design so BN stats stay exact under tiling.
        b_tile = max(8, _round_up(block_b, 8))
        B_pad = _round_up(B, b_tile)
        n_tiles = B_pad // b_tile
        if B_pad != B:
            x_bf = jnp.zeros((B_pad, D), jnp.bfloat16).at[:B].set(x_bf)
        x_spec = pl.BlockSpec((b_tile, D), lambda i: (i, 0))

        # Pass 1: reduction over batch tiles ("arbitrary" axis, accumulator).
        h_sum, h_sq = pl.pallas_call(
            functools.partial(stats_kernel, batch=B, padded_batch=B_pad),
            out_shape=(jax.ShapeDtypeStruct((1, H), jnp.float32),
                       jax.ShapeDtypeStruct((1, H), jnp.float32)),
            grid_spec=pltpu.PrefetchScalarGridSpec(
                num_scalar_prefetch=0,
                grid=(n_tiles,),
                in_specs=[x_spec, full((D, H)), full((1, H))],
                out_specs=(full((1, H)), full((1, H))),
            ),
            compiler_params=cparams("arbitrary"),
        )(x_bf, w1, b1)

        # Pass 2: tiles are independent -> "parallel" (megacore / both v7x TCs).
        out_pad = pl.pallas_call(
            functools.partial(apply_kernel, batch=B),
            out_shape=jax.ShapeDtypeStruct((B_pad, C_pad), jnp.float32),
            grid_spec=pltpu.PrefetchScalarGridSpec(
                num_scalar_prefetch=0,
                grid=(n_tiles,),
                in_specs=[x_spec, full((D, H)), full((1, H)), full((1, H)),
                          full((H, C_pad)), full((1, C_pad)),
                          full((1, H)), full((1, H))],
                out_specs=pl.BlockSpec((b_tile, C_pad), lambda i: (i, 0)),
            ),
            compiler_params=cparams("parallel"),
        )(x_bf, w1, b1, gamma, w2, b2, h_sum, h_sq)

    if slice_output:
        return out_pad[:B, :num_classes]
    return out_pad  # lane-padded (.., 128); padded class lanes are exactly 0


def init_params(key, input_dim, num_classes):
    # Kaiming-normal (fan_in, gain=sqrt(2)) for Linear weights, zero biases,
    # BatchNorm affine init gamma=1, beta=0 (matches model_init()).
    k1, k2 = jax.random.split(key)
    std1 = (2.0 / input_dim) ** 0.5
    std2 = (2.0 / HIDDEN) ** 0.5
    w1 = jax.random.normal(k1, (input_dim, HIDDEN), jnp.float32) * std1
    b1 = jnp.zeros((1, HIDDEN), jnp.float32)
    gamma = jnp.ones((1, HIDDEN), jnp.float32)
    beta = jnp.zeros((1, HIDDEN), jnp.float32)
    w2 = jax.random.normal(k2, (HIDDEN, num_classes), jnp.float32) * std2
    b2 = jnp.zeros((1, num_classes), jnp.float32)
    return w1, b1, gamma, beta, w2, b2


def _reference(x, w1, b1, gamma, beta, w2, b2):
    """Pure-JAX f32 reference of the PyTorch forward (BN in training mode)."""
    h = jnp.maximum(x @ w1 + b1, 0.0)
    mu = jnp.mean(h, axis=0, keepdims=True)
    va = jnp.mean((h - mu) ** 2, axis=0, keepdims=True)
    hn = (h - mu) / jnp.sqrt(va + BN_EPS) * gamma + beta
    logits = hn @ w2 + b2
    return jax.nn.softmax(logits, axis=-1)


if __name__ == "__main__":
    batch = 8
    input_dim = 32
    num_classes = 10

    key = jax.random.PRNGKey(0)
    kx, kp = jax.random.split(key)
    x = jax.random.normal(kx, (batch, input_dim), jnp.float32)
    raw = init_params(kp, input_dim, num_classes)
    params = prepare_params(*raw)   # one-time weight prep (hoisted)

    probs = mlp_forward(x, params, num_classes=num_classes)
    jax.block_until_ready(probs)

    # sanity: shape + rows of softmax output sum to 1
    assert probs.shape == (batch, num_classes)
    assert jnp.allclose(jnp.sum(probs, axis=-1), 1.0, atol=1e-5)

    # compare against f32 reference (bf16 MXU operands -> loose tolerance)
    ref = _reference(x, *raw)
    assert jnp.allclose(probs, ref, atol=5e-2), float(jnp.max(jnp.abs(probs - ref)))

    # exercise the two-pass tiled path (block_b < batch) and confirm it matches
    # the fused path (BN stats must still cover the full batch under tiling).
    xb = jax.random.normal(kx, (30, input_dim), jnp.float32)
    p_fused = mlp_forward(xb, params, num_classes=num_classes)
    p_tiled = mlp_forward(xb, params, num_classes=num_classes, block_b=8)
    jax.block_until_ready(p_tiled)
    assert p_fused.shape == (30, num_classes) and p_tiled.shape == (30, num_classes)
    assert jnp.allclose(p_fused, p_tiled, atol=1e-3)
    assert jnp.allclose(jnp.sum(p_tiled, axis=-1), 1.0, atol=1e-5)

    print("KERNEL_OK")
</pallas_src>

<mosaic_0001>
module attributes {stable_mosaic.version = 11 : i64} {
  func.func @fused_kernel(%arg0: i32, %arg1: memref<8x32xbf16, #tpu.memory_space<vmem>>, %arg2: memref<32x256xbf16, #tpu.memory_space<vmem>>, %arg3: memref<1x256xf32, #tpu.memory_space<vmem>>, %arg4: memref<1x256xf32, #tpu.memory_space<vmem>>, %arg5: memref<256x128xbf16, #tpu.memory_space<vmem>>, %arg6: memref<1x128xf32, #tpu.memory_space<vmem>>, %arg7: memref<8x128xf32, #tpu.memory_space<vmem>>) attributes {dimension_semantics = [#tpu.dimension_semantics<arbitrary>], iteration_bounds = array<i64: 1>, scalar_prefetch = 0 : i64, scratch_operands = 0 : i64, tpu.core_type = #tpu.core_type<tc>, window_params = [{pipeline_mode = #tpu.pipeline_mode<synchronous>, transform_indices = @transform_0, window_bounds = array<i64: 8, 32>}, {pipeline_mode = #tpu.pipeline_mode<synchronous>, transform_indices = @transform_1, window_bounds = array<i64: 32, 256>}, {pipeline_mode = #tpu.pipeline_mode<synchronous>, transform_indices = @transform_2, window_bounds = array<i64: 1, 256>}, {pipeline_mode = #tpu.pipeline_mode<synchronous>, transform_indices = @transform_3, window_bounds = array<i64: 1, 256>}, {pipeline_mode = #tpu.pipeline_mode<synchronous>, transform_indices = @transform_4, window_bounds = array<i64: 256, 128>}, {pipeline_mode = #tpu.pipeline_mode<synchronous>, transform_indices = @transform_5, window_bounds = array<i64: 1, 128>}, {pipeline_mode = #tpu.pipeline_mode<synchronous>, transform_indices = @transform_6, window_bounds = array<i64: 8, 128>}]} {
    %c0 = arith.constant 0 : index
    %c0_0 = arith.constant 0 : index
    %0 = vector.load %arg1[%c0, %c0_0] : memref<8x32xbf16, #tpu.memory_space<vmem>>, vector<8x32xbf16>
    %c0_1 = arith.constant 0 : index
    %c0_2 = arith.constant 0 : index
    %1 = vector.load %arg2[%c0_1, %c0_2] : memref<32x256xbf16, #tpu.memory_space<vmem>>, vector<32x256xbf16>
    %cst = arith.constant dense<0.000000e+00> : vector<8x256xf32>
    %2 = tpu.matmul %0, %1, %cst {dimension_numbers = #tpu.dot_dimension_numbers<[1], [0], [0], [1], [0, 0, 1, 1], [], []>} : vector<8x32xbf16>, vector<32x256xbf16>, vector<8x256xf32> -> vector<8x256xf32>
    %c0_3 = arith.constant 0 : index
    %c0_4 = arith.constant 0 : index
    %3 = vector.load %arg3[%c0_3, %c0_4] : memref<1x256xf32, #tpu.memory_space<vmem>>, vector<1x256xf32>
    %4 = vector.broadcast %3 : vector<1x256xf32> to vector<8x256xf32>
    %5 = arith.addf %2, %4 : vector<8x256xf32>
    %cst_5 = arith.constant 0.000000e+00 : f32
    %6 = vector.broadcast %cst_5 : f32 to vector<8x256xf32>
    %7 = arith.maximumf %5, %6 : vector<8x256xf32>
    %cst_6 = arith.constant dense<0.000000e+00> : vector<256xf32>
    %8 = vector.multi_reduction <add>, %7, %cst_6 [0] : vector<8x256xf32> to vector<256xf32>
    %9 = vector.shape_cast %8 : vector<256xf32> to vector<1x256xf32>
    %cst_7 = arith.constant 1.250000e-01 : f32
    %10 = vector.broadcast %cst_7 : f32 to vector<1x256xf32>
    %11 = arith.mulf %9, %10 : vector<1x256xf32>
    %12 = arith.mulf %7, %7 : vector<8x256xf32>
    %cst_8 = arith.constant dense<0.000000e+00> : vector<256xf32>
    %13 = vector.multi_reduction <add>, %12, %cst_8 [0] : vector<8x256xf32> to vector<256xf32>
    %14 = vector.shape_cast %13 : vector<256xf32> to vector<1x256xf32>
    %cst_9 = arith.constant 1.250000e-01 : f32
    %15 = vector.broadcast %cst_9 : f32 to vector<1x256xf32>
    %16 = arith.mulf %14, %15 : vector<1x256xf32>
    %17 = arith.mulf %11, %11 : vector<1x256xf32>
    %18 = arith.subf %16, %17 : vector<1x256xf32>
    %c0_10 = arith.constant 0 : index
    %c0_11 = arith.constant 0 : index
    %19 = vector.load %arg4[%c0_10, %c0_11] : memref<1x256xf32, #tpu.memory_space<vmem>>, vector<1x256xf32>
    %cst_12 = arith.constant 9.99999974E-6 : f32
    %20 = vector.broadcast %cst_12 : f32 to vector<1x256xf32>
    %21 = arith.addf %18, %20 : vector<1x256xf32>
    %22 = math.rsqrt %21 : vector<1x256xf32>
    %23 = arith.mulf %19, %22 : vector<1x256xf32>
    %cst_13 = arith.constant 0.000000e+00 : f32
    %24 = vector.broadcast %cst_13 : f32 to vector<1x256xf32>
    %25 = arith.subf %24, %11 : vector<1x256xf32>
    %26 = arith.mulf %25, %23 : vector<1x256xf32>
    %27 = vector.broadcast %23 : vector<1x256xf32> to vector<8x256xf32>
    %28 = arith.mulf %7, %27 : vector<8x256xf32>
    %29 = vector.broadcast %26 : vector<1x256xf32> to vector<8x256xf32>
    %30 = arith.addf %28, %29 : vector<8x256xf32>
    %31 = arith.truncf %30 : vector<8x256xf32> to vector<8x256xbf16>
    %c0_14 = arith.constant 0 : index
    %c0_15 = arith.constant 0 : index
    %32 = vector.load %arg5[%c0_14, %c0_15] : memref<256x128xbf16, #tpu.memory_space<vmem>>, vector<256x128xbf16>
    %cst_16 = arith.constant dense<0.000000e+00> : vector<8x128xf32>
    %33 = tpu.matmul %31, %32, %cst_16 {dimension_numbers = #tpu.dot_dimension_numbers<[1], [0], [0], [1], [0, 0, 1, 1], [], []>} : vector<8x256xbf16>, vector<256x128xbf16>, vector<8x128xf32> -> vector<8x128xf32>
    %c0_17 = arith.constant 0 : index
    %c0_18 = arith.constant 0 : index
    %34 = vector.load %arg6[%c0_17, %c0_18] : memref<1x128xf32, #tpu.memory_space<vmem>>, vector<1x128xf32>
    %35 = vector.broadcast %34 : vector<1x128xf32> to vector<8x128xf32>
    %36 = arith.addf %33, %35 : vector<8x128xf32>
    %cst_19 = arith.constant dense<0xFF800000> : vector<8xf32>
    %37 = vector.multi_reduction <maximumf>, %36, %cst_19 [1] : vector<8x128xf32> to vector<8xf32>
    %38 = vector.shape_cast %37 : vector<8xf32> to vector<8x1xf32>
    %39 = vector.broadcast %38 : vector<8x1xf32> to vector<8x128xf32>
    %40 = arith.subf %36, %39 : vector<8x128xf32>
    %41 = math.exp %40 : vector<8x128xf32>
    %cst_20 = arith.constant dense<0.000000e+00> : vector<8xf32>
    %42 = vector.multi_reduction <add>, %41, %cst_20 [1] : vector<8x128xf32> to vector<8xf32>
    %43 = vector.shape_cast %42 : vector<8xf32> to vector<8x1xf32>
    %44 = tpu.reciprocal %43 {approx = true} : vector<8x1xf32> -> vector<8x1xf32>
    %45 = arith.mulf %43, %44 : vector<8x1xf32>
    %cst_21 = arith.constant 2.000000e+00 : f32
    %46 = vector.broadcast %cst_21 : f32 to vector<8x1xf32>
    %47 = arith.subf %46, %45 : vector<8x1xf32>
    %48 = arith.mulf %44, %47 : vector<8x1xf32>
    %49 = vector.broadcast %48 : vector<8x1xf32> to vector<8x128xf32>
    %50 = arith.mulf %41, %49 : vector<8x128xf32>
    %c0_22 = arith.constant 0 : index
    %c0_23 = arith.constant 0 : index
    %51 = vector.load %arg7[%c0_22, %c0_23] : memref<8x128xf32, #tpu.memory_space<vmem>>, vector<8x128xf32>
    tpu.vector_store %arg7[%c0_22, %c0_23], %50 {strides = array<i32>} : memref<8x128xf32, #tpu.memory_space<vmem>>, vector<8x128xf32>,
    return
  }
  func.func @transform_0(%arg0: i32) -> (i32, i32) {
    %c0_i32 = arith.constant 0 : i32
    %c0_i32_0 = arith.constant 0 : i32
    %c0_i32_1 = arith.constant 0 : i32
    return %c0_i32, %c0_i32_0 : i32, i32
  }
  func.func @transform_1(%arg0: i32) -> (i32, i32) {
    %c0_i32 = arith.constant 0 : i32
    %c0_i32_0 = arith.constant 0 : i32
    %c0_i32_1 = arith.constant 0 : i32
    return %c0_i32, %c0_i32_0 : i32, i32
  }
  func.func @transform_2(%arg0: i32) -> (i32, i32) {
    %c0_i32 = arith.constant 0 : i32
    %c0_i32_0 = arith.constant 0 : i32
    %c0_i32_1 = arith.constant 0 : i32
    return %c0_i32, %c0_i32_0 : i32, i32
  }
  func.func @transform_3(%arg0: i32) -> (i32, i32) {
    %c0_i32 = arith.constant 0 : i32
    %c0_i32_0 = arith.constant 0 : i32
    %c0_i32_1 = arith.constant 0 : i32
    return %c0_i32, %c0_i32_0 : i32, i32
  }
  func.func @transform_4(%arg0: i32) -> (i32, i32) {
    %c0_i32 = arith.constant 0 : i32
    %c0_i32_0 = arith.constant 0 : i32
    %c0_i32_1 = arith.constant 0 : i32
    return %c0_i32, %c0_i32_0 : i32, i32
  }
  func.func @transform_5(%arg0: i32) -> (i32, i32) {
    %c0_i32 = arith.constant 0 : i32
    %c0_i32_0 = arith.constant 0 : i32
    %c0_i32_1 = arith.constant 0 : i32
    return %c0_i32, %c0_i32_0 : i32, i32
  }
  func.func @transform_6(%arg0: i32) -> (i32, i32) {
    %c0_i32 = arith.constant 0 : i32
    %c0_i32_0 = arith.constant 0 : i32
    %c0_i32_1 = arith.constant 0 : i32
    return %c0_i32, %c0_i32_0 : i32, i32
  }
}

</mosaic_0001>

<llo_original>
// kernel: mlp_forward.1
$region0: #{mlp_forward.1}
  #allocation0 [shape = 'u32[]', space=smem, size = 0x4, offset = 0x4, fixed_abs, tag = 'smem constant byte address 0x4 - core index']
  #allocation1 [shape = 'u32[144,128]{1,0:T(1,128)}', space=vmem, size = 0x12000, scoped, tag = 'internal scratch']
  %s0 = inlined_call_operand.vmem [shape: bf16[8,32], index: 0, kind: input, shape index: {}]
  %s1 = inlined_call_operand.hbm [shape: bf16[32,256], index: 1, kind: input, shape index: {}]
  %s2 = inlined_call_operand.vmem [shape: f32[1,256], index: 2, kind: input, shape index: {}]
  %s3 = inlined_call_operand.vmem [shape: f32[1,256], index: 3, kind: input, shape index: {}]
  %s4 = inlined_call_operand.hbm [shape: bf16[256,128], index: 4, kind: input, shape index: {}]
  %s5 = inlined_call_operand.vmem [shape: f32[1,128], index: 5, kind: input, shape index: {}]
  %s6 = inlined_call_operand.hbm [shape: f32[8,128], index: 6, kind: output, shape index: {}]
  %s7 = sld [smem:[#allocation0]]
  $region42: #{mlp_forward.1} parent=0
    _
  %s9 = ssub.s32 1, %s7
  %s10 = scalar_select 0, %s9, %s7
  $region1: #{mlp_forward.1} parent=0
    #allocation2 [shape = 'u8[16384]{0}', space=vmem, size = 0x4000, scoped, tag = 'input window, operand 1, single buffered']
    #allocation3 [shape = 's32[1]{0}', space=sflag, size = 0x4, scoped, tag = 'scoped memory for mlp_forward.1']
    #allocation4 [shape = 's32[1]{0}', space=sflag, size = 0x4, scoped, tag = 'scoped memory for mlp_forward.1']
    #allocation5 [shape = 'u8[65536]{0}', space=vmem, size = 0x10000, scoped, tag = 'input window, operand 4, single buffered']
    #allocation6 [shape = 's32[1]{0}', space=sflag, size = 0x4, scoped, tag = 'scoped memory for mlp_forward.1']
    #allocation7 [shape = 'u8[4096]{0}', space=vmem, size = 0x1000, scoped, tag = 'output window, operand 0, single buffered']
    %11 = vsyncpa [#allocation3], 0
    %12 = vsyncpa [#allocation6], 0
    %13 = vsyncpa [#allocation4], 0
    // Predicated region
    $region2: #{mlp_forward.1} parent=1 // pred_check
      _
    $region3: #{mlp_forward.1} parent=1 // pred_check_branch
      %15 = sbr.rel (0) target = $region5
    $region4: #{mlp_forward.1} parent=1 // pred_region
      _
    $region5: #{mlp_forward.1} parent=1 // pred_fallthru
      _
    // Predicated region
    $region6: #{mlp_forward.1} parent=1 // pred_check
      _
    $region7: #{mlp_forward.1} parent=1 // pred_check_branch
      %17 = sbr.rel (0) target = $region9
    $region8: #{mlp_forward.1} parent=1 // pred_region
      %s19 = ssub.s32 512, 512
      %20 = vsyncadd [#allocation3], %s19
      %s21 = sshll.u32 [#allocation2], 4
      %s22 = int_to_ptr.vmem [resolvable:$true] %s21
      %27 = dma.hbm_to_vmem [thread:$0]  %s1, 512, %s22, [#allocation3], 128, 128, 8
    $region9: #{mlp_forward.1} parent=1 // pred_fallthru
      _
    // Predicated region
    $region10: #{mlp_forward.1} parent=1 // pred_check
      _
    $region11: #{mlp_forward.1} parent=1 // pred_check_branch
      %29 = sbr.rel (0) target = $region13
    $region12: #{mlp_forward.1} parent=1 // pred_region
      _
    $region13: #{mlp_forward.1} parent=1 // pred_fallthru
      _
    // Predicated region
    $region14: #{mlp_forward.1} parent=1 // pred_check
      _
    $region15: #{mlp_forward.1} parent=1 // pred_check_branch
      %31 = sbr.rel (0) target = $region17
    $region16: #{mlp_forward.1} parent=1 // pred_region
      _
    $region17: #{mlp_forward.1} parent=1 // pred_fallthru
      _
    // Predicated region
    $region18: #{mlp_forward.1} parent=1 // pred_check
      _
    $region19: #{mlp_forward.1} parent=1 // pred_check_branch
      %33 = sbr.rel (0) target = $region21
    $region20: #{mlp_forward.1} parent=1 // pred_region
      %s35 = ssub.s32 2048, 2048
      %36 = vsyncadd [#allocation6], %s35
      %s37 = sshll.u32 [#allocation5], 4
      %s38 = int_to_ptr.vmem [resolvable:$true] %s37
      %43 = dma.hbm_to_vmem [thread:$0]  %s4, 2048, %s38, [#allocation6], 64, 64, 4
    $region21: #{mlp_forward.1} parent=1 // pred_fallthru
      _
    // Predicated region
    $region22: #{mlp_forward.1} parent=1 // pred_check
      _
    $region23: #{mlp_forward.1} parent=1 // pred_check_branch
      %45 = sbr.rel (0) target = $region25
    $region24: #{mlp_forward.1} parent=1 // pred_region
      _
    $region25: #{mlp_forward.1} parent=1 // pred_fallthru
      _
    // Predicated region
    $region26: #{mlp_forward.1} parent=1 // pred_check
      _
    $region27: #{mlp_forward.1} parent=1 // pred_check_branch
      %47 = sbr.rel (0) target = $region29
    $region28: #{mlp_forward.1} parent=1 // pred_region
      %48 = dma.done [#allocation3], 512
    $region29: #{mlp_forward.1} parent=1 // pred_fallthru
      _
    // Predicated region
    $region30: #{mlp_forward.1} parent=1 // pred_check
      _
    $region31: #{mlp_forward.1} parent=1 // pred_check_branch
      %50 = sbr.rel (0) target = $region33
    $region32: #{mlp_forward.1} parent=1 // pred_region
      %51 = dma.done [#allocation6], 2048
    $region33: #{mlp_forward.1} parent=1 // pred_fallthru
      _
    %v53 = vld [vmem:[%s0] sm:$0xf]
    %v54 = vld [vmem:[#allocation2] sm:$0xff]
    %v55 = vld [vmem:[#allocation2 + $0x8] sm:$0xff]
    %v56 = vld [vmem:[#allocation2 + $0x10] sm:$0xff]
    %v57 = vld [vmem:[#allocation2 + $0x18] sm:$0xff]
    %v58 = vld [vmem:[%s2] sm:$0x3]
    %v60 = vlaneseq
    %v61 = vshrl.u32 %v60, 7
    %v62 = vsub.s32 0, %v61
    %v63 = vrot.slane %v58, %v62
    %v64 = vlaneseq
    %v65 = vshrl.u32 %v64, 7
    %v66 = vsub.s32 1, %v65
    %v67 = vrot.slane %v58, %v66
    %v74 = vunpack.c.l.b16 %v54
    %v75 = vunpack.c.h.b16 %v54
    %v76 = vunpack.c.l.b16 %v55
    %v77 = vunpack.c.h.b16 %v55
    %v78 = vunpack.c.l.b16 %v56
    %v79 = vunpack.c.h.b16 %v56
    %v80 = vunpack.c.l.b16 %v57
    %v81 = vunpack.c.h.b16 %v57
    %v82 = vpack.c.b16 %v76, %v74
    %v83 = vpack.c.b16 %v77, %v75
    %v84 = vpack.c.b16 %v80, %v78
    %v85 = vpack.c.b16 %v81, %v79
    %vm90 = vcmask 261120
    %v92 = vsel %vm90, %v53, 0
    %94 = vmatprep.subr.bf16.mxu0 %v83
    %95 = vmatpush1.bf16.msra.mxu0 %v82
    %96 = vmatprep.subr.bf16.mxu0 %v85
    %97 = vmatpush1.bf16.msra.mxu0 %v84
    %98 = vmatprep.subr.bf16.mxu0 0
    %99 = vmatpush1.bf16.msra.mxu0 0
    %100 = vmatprep.subr.bf16.mxu0 0
    %101 = vmatpush1.bf16.msra.mxu0 0
    %102 = vmatprep.subr.bf16.mxu0 0
    %103 = vmatpush1.bf16.msra.mxu0 0
    %104 = vmatprep.subr.bf16.mxu0 0
    %105 = vmatpush1.bf16.msra.mxu0 0
    %106 = vmatprep.subr.bf16.mxu0 0
    %107 = vmatpush1.bf16.msra.mxu0 0
    %108 = vmatprep.subr.bf16.mxu0 0
    %109 = vmatpush1.bf16.msra.mxu0 0
    %110 = vmatprep.subr.bf16.mxu0 0
    %111 = vmatpush1.bf16.msra.mxu0 0
    %112 = vmatprep.subr.bf16.mxu0 0
    %113 = vmatpush1.bf16.msra.mxu0 0
    %114 = vmatprep.subr.bf16.mxu0 0
    %115 = vmatpush1.bf16.msra.mxu0 0
    %116 = vmatprep.subr.bf16.mxu0 0
    %117 = vmatpush1.bf16.msra.mxu0 0
    %118 = vmatprep.subr.bf16.mxu0 0
    %119 = vmatpush1.bf16.msra.mxu0 0
    %120 = vmatprep.subr.bf16.mxu0 0
    %121 = vmatpush1.bf16.msra.mxu0 0
    %122 = vmatprep.subr.bf16.mxu0 0
    %123 = vmatpush1.bf16.msra.mxu0 0
    %124 = vmatprep.subr.bf16.mxu0 0
    %125 = vmatpush1.bf16.msra.mxu0 0
    %126 = vmatprep.mubr.bf16.mxu0 0
    %127 = vmatmul.mubr.bf16.gmra.mrb[0].mxu0 %v92
    %v128 = vpop.f32.mrb[0].mxu0
    %v129 = vadd.f32 %v63, %v128
    %v130 = vpop.f32.mrb[0].mxu0
    %v131 = vadd.f32 %v67, %v130
    %v132 = vpop.f32.mrb[0].mxu0
    %v133 = vpop.f32.mrb[0].mxu0
    %134 = vdwg.mxu0
    %v135 = vmax.f32 %v129, 0.0
    %v136 = vmax.f32 %v131, 0.0
    %v137 = vrot.slane %v135, 4
    %v138 = vadd.f32 %v135, %v137
    %v139 = vrot.slane %v138, 2
    %v140 = vadd.f32 %v138, %v139
    %v141 = vrot.slane %v140, 1
    %v142 = vadd.f32 %v140, %v141
    %v143 = vrot.slane %v136, 4
    %v144 = vadd.f32 %v136, %v143
    %v145 = vrot.slane %v144, 2
    %v146 = vadd.f32 %v144, %v145
    %v147 = vrot.slane %v146, 1
    %v148 = vadd.f32 %v146, %v147
    %v149 = vmul.f32 %v142, 0.125
    %v150 = vmul.f32 %v148, 0.125
    %v151 = vmul.f32 %v135, %v135
    %v152 = vmul.f32 %v136, %v136
    %v153 = vrot.slane %v151, 4
    %v154 = vadd.f32 %v151, %v153
    %v155 = vrot.slane %v154, 2
    %v156 = vadd.f32 %v154, %v155
    %v157 = vrot.slane %v156, 1
    %v158 = vadd.f32 %v156, %v157
    %v159 = vrot.slane %v152, 4
    %v160 = vadd.f32 %v152, %v159
    %v161 = vrot.slane %v160, 2
    %v162 = vadd.f32 %v160, %v161
    %v163 = vrot.slane %v162, 1
    %v164 = vadd.f32 %v162, %v163
    %v165 = vmul.f32 %v158, 0.125
    %v166 = vmul.f32 %v164, 0.125
    %v167 = vmul.f32 %v149, %v149
    %v168 = vmul.f32 %v150, %v150
    %v169 = vsub.f32 %v165, %v167
    %v170 = vsub.f32 %v166, %v168
    %v171 = vld [vmem:[%s3] sm:$0x3]
    %v172 = vadd.f32 %v169, 1e-05
    %v173 = vadd.f32 %v170, 1e-05
    %v174 = vrsqrt.pop %v172
    %v175 = vrsqrt.pop %v173
    %v178 = vcombine.low %v174, %v175
    %v180 = vunpack.c.l.s4 1966171168
    %v181 = vunpack.c.0.s8 %v180
    %v182 = vlaneseq
    %v183 = vshrl.u32 %v182, 7
    %v184 = vsub.s32 %v181, %v183
    %v185 = vrot.slane %v178, %v184
    %v187 = vunpack.c.l.s4 1966171168
    %v188 = vunpack.c.0.s8 %v187
    %v189 = vlaneseq
    %v190 = vshrl.u32 %v189, 7
    %v191 = vsub.s32 %v188, %v190
    %v192 = vrot.slane %v185, %v191
    %v194 = vmul.f32 %v171, %v192
    %v195 = vsub.f32 0.0, %v149
    %v196 = vsub.f32 0.0, %v150
    %v198 = vlaneseq
    %v199 = vshrl.u32 %v198, 7
    %v200 = vsub.s32 0, %v199
    %v201 = vrot.slane %v194, %v200
    %v202 = vlaneseq
    %v203 = vshrl.u32 %v202, 7
    %v204 = vsub.s32 1, %v203
    %v205 = vrot.slane %v194, %v204
    %v208 = vmul.f32 %v195, %v201
    %v209 = vmul.f32 %v196, %v205
    %v210 = vmul.f32 %v135, %v201
    %v211 = vmul.f32 %v136, %v205
    %v212 = vlaneseq
    %v213 = vshrl.u32 %v212, 7
    %v214 = vsub.s32 0, %v213
    %v215 = vrot.slane %v208, %v214
    %v216 = vlaneseq
    %v217 = vshrl.u32 %v216, 7
    %v218 = vsub.s32 0, %v217
    %v219 = vrot.slane %v209, %v218
    %v220 = vadd.f32 %v210, %v215
    %v221 = vadd.f32 %v211, %v219
    %v222 = vpack.c.bf16 %v220, %v220
    %v223 = vpack.c.bf16 %v221, %v221
    %v224 = vld [vmem:[#allocation5] sm:$0xf]
    %v225 = vld [vmem:[#allocation5 + $0x4] sm:$0xf]
    %v226 = vld [vmem:[#allocation5 + $0x8] sm:$0xf]
    %v227 = vld [vmem:[#allocation5 + $0xc] sm:$0xf]
    %v228 = vld [vmem:[#allocation5 + $0x10] sm:$0xf]
    %v229 = vld [vmem:[#allocation5 + $0x14] sm:$0xf]
    %v230 = vld [vmem:[#allocation5 + $0x18] sm:$0xf]
    %v231 = vld [vmem:[#allocation5 + $0x1c] sm:$0xf]
    %v232 = vld [vmem:[#allocation5 + $0x20] sm:$0xf]
    %v233 = vld [vmem:[#allocation5 + $0x24] sm:$0xf]
    %v234 = vld [vmem:[#allocation5 + $0x28] sm:$0xf]
    %v235 = vld [vmem:[#allocation5 + $0x2c] sm:$0xf]
    %v236 = vld [vmem:[#allocation5 + $0x30] sm:$0xf]
    %v237 = vld [vmem:[#allocation5 + $0x34] sm:$0xf]
    %v238 = vld [vmem:[#allocation5 + $0x38] sm:$0xf]
    %v239 = vld [vmem:[#allocation5 + $0x3c] sm:$0xf]
    %v240 = vld [vmem:[#allocation5 + $0x40] sm:$0xf]
    %v241 = vld [vmem:[#allocation5 + $0x44] sm:$0xf]
    %v242 = vld [vmem:[#allocation5 + $0x48] sm:$0xf]
    %v243 = vld [vmem:[#allocation5 + $0x4c] sm:$0xf]
    %v244 = vld [vmem:[#allocation5 + $0x50] sm:$0xf]
    %v245 = vld [vmem:[#allocation5 + $0x54] sm:$0xf]
    %v246 = vld [vmem:[#allocation5 + $0x58] sm:$0xf]
    %v247 = vld [vmem:[#allocation5 + $0x5c] sm:$0xf]
    %v248 = vld [vmem:[#allocation5 + $0x60] sm:$0xf]
    %v249 = vld [vmem:[#allocation5 + $0x64] sm:$0xf]
    %v250 = vld [vmem:[#allocation5 + $0x68] sm:$0xf]
    %v251 = vld [vmem:[#allocation5 + $0x6c] sm:$0xf]
    %v252 = vld [vmem:[#allocation5 + $0x70] sm:$0xf]
    %v253 = vld [vmem:[#allocation5 + $0x74] sm:$0xf]
    %v254 = vld [vmem:[#allocation5 + $0x78] sm:$0xf]
    %v255 = vld [vmem:[#allocation5 + $0x7c] sm:$0xf]
    %v256 = vld [vmem:[%s5] sm:$0x1]
    %v258 = vlaneseq
    %v259 = vshrl.u32 %v258, 7
    %v260 = vsub.s32 0, %v259
    %v261 = vrot.slane %v256, %v260
    %v295 = vunpack.c.l.b16 %v224
    %v296 = vunpack.c.l.b16 %v225
    %v297 = vunpack.c.l.b16 %v226
    %v298 = vunpack.c.l.b16 %v227
    %v299 = vunpack.c.l.b16 %v228
    %v300 = vunpack.c.l.b16 %v229
    %v301 = vunpack.c.l.b16 %v230
    %v302 = vunpack.c.l.b16 %v231
    %v303 = vunpack.c.l.b16 %v232
    %v304 = vunpack.c.l.b16 %v233
    %v305 = vunpack.c.l.b16 %v234
    %v306 = vunpack.c.l.b16 %v235
    %v307 = vunpack.c.l.b16 %v236
    %v308 = vunpack.c.l.b16 %v237
    %v309 = vunpack.c.l.b16 %v238
    %v310 = vunpack.c.l.b16 %v239
    %v311 = vunpack.c.l.b16 %v240
    %v312 = vunpack.c.l.b16 %v241
    %v313 = vunpack.c.l.b16 %v242
    %v314 = vunpack.c.l.b16 %v243
    %v315 = vunpack.c.l.b16 %v244
    %v316 = vunpack.c.l.b16 %v245
    %v317 = vunpack.c.l.b16 %v246
    %v318 = vunpack.c.l.b16 %v247
    %v319 = vunpack.c.l.b16 %v248
    %v320 = vunpack.c.l.b16 %v249
    %v321 = vunpack.c.l.b16 %v250
    %v322 = vunpack.c.l.b16 %v251
    %v323 = vunpack.c.l.b16 %v252
    %v324 = vunpack.c.l.b16 %v253
    %v325 = vunpack.c.l.b16 %v254
    %v326 = vunpack.c.l.b16 %v255
    %v327 = vpack.c.b16 %v296, %v295
    %v328 = vpack.c.b16 %v298, %v297
    %v329 = vpack.c.b16 %v300, %v299
    %v330 = vpack.c.b16 %v302, %v301
    %v331 = vpack.c.b16 %v304, %v303
    %v332 = vpack.c.b16 %v306, %v305
    %v333 = vpack.c.b16 %v308, %v307
    %v334 = vpack.c.b16 %v310, %v309
    %v335 = vpack.c.b16 %v312, %v311
    %v336 = vpack.c.b16 %v314, %v313
    %v337 = vpack.c.b16 %v316, %v315
    %v338 = vpack.c.b16 %v318, %v317
    %v339 = vpack.c.b16 %v320, %v319
    %v340 = vpack.c.b16 %v322, %v321
    %v341 = vpack.c.b16 %v324, %v323
    %v342 = vpack.c.b16 %v326, %v325
    %359 = vmatprep.subr.bf16.mxu0 0
    %360 = vmatpush1.bf16.msra.mxu0 %v327
    %361 = vmatprep.subr.bf16.mxu0 0
    %362 = vmatpush1.bf16.msra.mxu0 %v328
    %363 = vmatprep.subr.bf16.mxu0 0
    %364 = vmatpush1.bf16.msra.mxu0 %v329
    %365 = vmatprep.subr.bf16.mxu0 0
    %366 = vmatpush1.bf16.msra.mxu0 %v330
    %367 = vmatprep.subr.bf16.mxu0 0
    %368 = vmatpush1.bf16.msra.mxu0 %v331
    %369 = vmatprep.subr.bf16.mxu0 0
    %370 = vmatpush1.bf16.msra.mxu0 %v332
    %371 = vmatprep.subr.bf16.mxu0 0
    %372 = vmatpush1.bf16.msra.mxu0 %v333
    %373 = vmatprep.subr.bf16.mxu0 0
    %374 = vmatpush1.bf16.msra.mxu0 %v334
    %375 = vmatprep.subr.bf16.mxu0 0
    %376 = vmatpush1.bf16.msra.mxu0 %v335
    %377 = vmatprep.subr.bf16.mxu0 0
    %378 = vmatpush1.bf16.msra.mxu0 %v336
    %379 = vmatprep.subr.bf16.mxu0 0
    %380 = vmatpush1.bf16.msra.mxu0 %v337
    %381 = vmatprep.subr.bf16.mxu0 0
    %382 = vmatpush1.bf16.msra.mxu0 %v338
    %383 = vmatprep.subr.bf16.mxu0 0
    %384 = vmatpush1.bf16.msra.mxu0 %v339
    %385 = vmatprep.subr.bf16.mxu0 0
    %386 = vmatpush1.bf16.msra.mxu0 %v340
    %387 = vmatprep.subr.bf16.mxu0 0
    %388 = vmatpush1.bf16.msra.mxu0 %v341
    %389 = vmatprep.subr.bf16.mxu0 0
    %390 = vmatpush1.bf16.msra.mxu0 %v342
    %391 = vmatprep.mubr.bf16.mxu0 %v223
    %392 = vmatmul.mubr.bf16.gmra.mrb[0].mxu0 %v222
    %v393 = vpop.f32.mrb[0].mxu0
    %v394 = vadd.f32 %v261, %v393
    %v395 = vpop.f32.mrb[0].mxu0
    %v396 = vpop.f32.mrb[0].mxu0
    %v397 = vpop.f32.mrb[0].mxu0
    %398 = vdwg.mxu0
    %399 = vmax.xlane.f32.xlu0 %v394
    %v400 = vpop.xlane.xlu0 %399
    %v401 = vsub.f32 %v394, %v400
    %v402 = vmul.f32 %v401, 1.442695
    %v403 = vpow.pop %v402
    %404 = vadd.xlane.f32.xlu0 %v403
    %v405 = vpop.xlane.xlu0 %404
    %v406 = vrcp.pop %v405
    %v407 = vmul.f32 %v405, %v406
    %v408 = vsub.f32 2.0, %v407
    %v409 = vmul.f32 %v406, %v408
    %v410 = vmul.f32 %v403, %v409
    %411 = vst [vmem:[#allocation7] sm:$0xff] %v410
    // Predicated region
    $region34: #{mlp_forward.1} parent=1 // pred_check
      _
    $region35: #{mlp_forward.1} parent=1 // pred_check_branch
      %413 = sbr.rel (0) target = $region37
    $region36: #{mlp_forward.1} parent=1 // pred_region
      %s415 = ssub.s32 128, 128
      %416 = vsyncadd [#allocation4], %s415
      %s418 = sshll.u32 [#allocation7], 4
      %s419 = int_to_ptr.vmem [resolvable:$true] %s418
      %421 = dma.vmem_to_hbm [thread:$0]  %s419, 128, %s6, [#allocation4]
    $region37: #{mlp_forward.1} parent=1 // pred_fallthru
      _
    // Predicated region
    $region38: #{mlp_forward.1} parent=1 // pred_check
      _
    $region39: #{mlp_forward.1} parent=1 // pred_check_branch
      %423 = sbr.rel (0) target = $region41
    $region40: #{mlp_forward.1} parent=1 // pred_region
      %424 = dma.done [#allocation4], 128
    $region41: #{mlp_forward.1} parent=1 // pred_fallthru
      _
    %425 = vsyncpa [#allocation3], 1
    %426 = vsyncpa [#allocation6], 1
    %427 = vsyncpa [#allocation4], 1

</llo_original>
